<compile_context>
chip_gen: v7x
topology: tpu7x:2x2x1
jax: 0.10.0
libtpu: 0.0.40
codegen_flags: <defaults>
</compile_context>

<pallas_src>
import jax
import jax.numpy as jnp
from jax.experimental import pallas as pl
from jax.experimental.pallas import tpu as pltpu


def sdpa_kernel(inv_scale_ref, p_ref, q_ref, k_ref, u_ref, o_ref):
    # inv_scale_ref, p_ref: (1,) SMEM scalars
    # q_ref (x1): (B, S, D) VMEM   k_ref (x10): (B, S, D) VMEM
    # u_ref: (B, S, S) VMEM dropout uniforms in [0, 1)
    q = q_ref[...]                       # (B, S, D)
    k = k_ref[...]                       # (B, S, D)
    u = u_ref[...]                       # (B, S, S)
    inv_scale = inv_scale_ref[0]
    p = p_ref[0]

    # v1 = q @ k^T ; v2 = v1 / scale   (batched MXU matmul, f32 accumulate;
    # contraction on the last dim of both operands -> no explicit transpose)
    s = jnp.einsum(
        "bqd,bkd->bqk", q, k, preferred_element_type=jnp.float32
    ) * inv_scale

    # v3 = softmax(v2, axis=-1)  (numerically stable; normalization is fused
    # below with the dropout rescale so only one reciprocal is needed)
    s = s - jnp.max(s, axis=-1, keepdims=True)
    e = jnp.exp(s)
    row_sum = jnp.sum(e, axis=-1, keepdims=True)      # (B, S, 1)

    # v4 = dropout(v3, p): keep w.p. (1-p), rescale kept elements by 1/(1-p).
    # NOTE: 1/(1-p) is unguarded; callers must pass p < 1 (harness clips to 0.9).
    keep = (u >= p).astype(jnp.float32)               # (B, S, S)
    inv_norm = pl.reciprocal(row_sum * (1.0 - p), approx=True)  # (B, S, 1), EUP
    w = e * keep * inv_norm                           # softmax * keep / (1-p)

    # v5 = v4 @ x1
    o_ref[...] = jnp.einsum(
        "bqk,bkd->bqd", w, q, preferred_element_type=jnp.float32
    ).astype(o_ref.dtype)


def sdpa(x1, x10, scale_factor, dropout_p, key=None):
    B, S, D = x1.shape
    assert x10.shape == (B, S, D), "x10 must match x1 (B, S, D) for this forward"
    if key is None:
        key = jax.random.PRNGKey(0)

    inv_scale = (1.0 / jnp.asarray(scale_factor, jnp.float32)).reshape(1)
    p = jnp.asarray(dropout_p, jnp.float32).reshape(1)
    # Dropout uniforms generated outside the kernel (portable; the TPU hardware
    # PRNG has no CPU-interpret lowering). Masking/rescale happen in-kernel.
    u = jax.random.uniform(key, (B, S, S), dtype=jnp.float32)

    # Whole problem in one invocation: full-array VMEM blocks, no grid.
    # (If batched over a grid on v7x, mark the batch axis "parallel" to use
    # both TensorCores — unnecessary here since everything fits in one call.)
    return pl.pallas_call(
        sdpa_kernel,
        out_shape=jax.ShapeDtypeStruct((B, S, D), jnp.float32),
        in_specs=[
            pl.BlockSpec(memory_space=pltpu.MemorySpace.SMEM),  # inv_scale
            pl.BlockSpec(memory_space=pltpu.MemorySpace.SMEM),  # dropout p
            pl.BlockSpec(memory_space=pltpu.MemorySpace.VMEM),  # x1 (q / v)
            pl.BlockSpec(memory_space=pltpu.MemorySpace.VMEM),  # x10 (k)
            pl.BlockSpec(memory_space=pltpu.MemorySpace.VMEM),  # dropout uniforms
        ],
        out_specs=pl.BlockSpec(memory_space=pltpu.MemorySpace.VMEM),
    )(inv_scale, p, x1, x10, u)


if __name__ == "__main__":
    key = jax.random.PRNGKey(0)
    k1, k2, k3, k4, k5 = jax.random.split(key, 5)

    B, S, D = 2, 8, 32
    x1 = jax.random.normal(k1, (B, S, D), dtype=jnp.float32)
    x10 = jax.random.normal(k2, (B, S, D), dtype=jnp.float32)
    # torch: scale_factor = randn(1).abs(); dropout_p = randn(1).abs()
    scale_factor = jnp.abs(jax.random.normal(k3, (1,), dtype=jnp.float32)) + 0.5
    # clip p into a valid dropout range (torch would error for p > 1)
    dropout_p = jnp.clip(
        jnp.abs(jax.random.normal(k4, (1,), dtype=jnp.float32)), 0.0, 0.9
    )

    out = sdpa(x1, x10, scale_factor, dropout_p, key=k5)
    jax.block_until_ready(out)
    assert out.shape == (B, S, D)
    print("KERNEL_OK")
</pallas_src>

<mosaic_0001>
module attributes {stable_mosaic.version = 11 : i64} {
  func.func @sdpa_kernel(%arg0: memref<1xf32, #tpu.memory_space<smem>>, %arg1: memref<1xf32, #tpu.memory_space<smem>>, %arg2: memref<2x8x32xf32, #tpu.memory_space<vmem>>, %arg3: memref<2x8x32xf32, #tpu.memory_space<vmem>>, %arg4: memref<2x8x8xf32, #tpu.memory_space<vmem>>, %arg5: memref<2x8x32xf32, #tpu.memory_space<vmem>>) attributes {dimension_semantics = [], scalar_prefetch = 0 : i64, scratch_operands = 0 : i64, tpu.core_type = #tpu.core_type<tc>} {
    %c0 = arith.constant 0 : index
    %c0_0 = arith.constant 0 : index
    %c0_1 = arith.constant 0 : index
    %0 = vector.load %arg2[%c0, %c0_0, %c0_1] : memref<2x8x32xf32, #tpu.memory_space<vmem>>, vector<2x8x32xf32>
    %c0_2 = arith.constant 0 : index
    %c0_3 = arith.constant 0 : index
    %c0_4 = arith.constant 0 : index
    %1 = vector.load %arg3[%c0_2, %c0_3, %c0_4] : memref<2x8x32xf32, #tpu.memory_space<vmem>>, vector<2x8x32xf32>
    %c0_5 = arith.constant 0 : index
    %c0_6 = arith.constant 0 : index
    %c0_7 = arith.constant 0 : index
    %2 = vector.load %arg4[%c0_5, %c0_6, %c0_7] : memref<2x8x8xf32, #tpu.memory_space<vmem>>, vector<2x8x8xf32>
    %c0_8 = arith.constant 0 : index
    %3 = memref.load %arg0[%c0_8] : memref<1xf32, #tpu.memory_space<smem>>
    %c0_9 = arith.constant 0 : index
    %4 = memref.load %arg1[%c0_9] : memref<1xf32, #tpu.memory_space<smem>>
    "tpu.trace_start"() <{level = 10 : i32, message = "bqd,bkd->bqk"}> : () -> ()
    %cst = arith.constant dense<0.000000e+00> : vector<2x8x8xf32>
    %5 = tpu.matmul %0, %1, %cst {dimension_numbers = #tpu.dot_dimension_numbers<[2], [2], [1], [1], [0, 0, 0, 1, 1, 1], [0], [0]>} : vector<2x8x32xf32>, vector<2x8x32xf32>, vector<2x8x8xf32> -> vector<2x8x8xf32>
    "tpu.trace_stop"() : () -> ()
    %6 = vector.broadcast %3 : f32 to vector<2x8x8xf32>
    %7 = arith.mulf %5, %6 : vector<2x8x8xf32>
    %cst_10 = arith.constant dense<0xFF800000> : vector<2x8xf32>
    %8 = vector.multi_reduction <maximumf>, %7, %cst_10 [2] : vector<2x8x8xf32> to vector<2x8xf32>
    %9 = vector.shape_cast %8 : vector<2x8xf32> to vector<2x8x1xf32>
    %10 = vector.broadcast %9 : vector<2x8x1xf32> to vector<2x8x8xf32>
    %11 = arith.subf %7, %10 : vector<2x8x8xf32>
    %12 = math.exp %11 : vector<2x8x8xf32>
    %cst_11 = arith.constant dense<0.000000e+00> : vector<2x8xf32>
    %13 = vector.multi_reduction <add>, %12, %cst_11 [2] : vector<2x8x8xf32> to vector<2x8xf32>
    %14 = vector.shape_cast %13 : vector<2x8xf32> to vector<2x8x1xf32>
    %15 = vector.broadcast %4 : f32 to vector<2x8x8xf32>
    %16 = arith.cmpf oge, %2, %15 : vector<2x8x8xf32>
    %17 = arith.extui %16 : vector<2x8x8xi1> to vector<2x8x8xi32>
    %18 = arith.sitofp %17 : vector<2x8x8xi32> to vector<2x8x8xf32>
    %cst_12 = arith.constant 1.000000e+00 : f32
    %19 = arith.subf %cst_12, %4 : f32
    %20 = vector.broadcast %19 : f32 to vector<2x8x1xf32>
    %21 = arith.mulf %14, %20 : vector<2x8x1xf32>
    %22 = tpu.reciprocal %21 {approx = true} : vector<2x8x1xf32> -> vector<2x8x1xf32>
    %23 = arith.mulf %12, %18 : vector<2x8x8xf32>
    %24 = vector.broadcast %22 : vector<2x8x1xf32> to vector<2x8x8xf32>
    %25 = arith.mulf %23, %24 : vector<2x8x8xf32>
    "tpu.trace_start"() <{level = 10 : i32, message = "bqk,bkd->bqd"}> : () -> ()
    %cst_13 = arith.constant dense<0.000000e+00> : vector<2x8x32xf32>
    %26 = tpu.matmul %25, %0, %cst_13 {dimension_numbers = #tpu.dot_dimension_numbers<[2], [1], [1], [2], [0, 0, 0, 1, 1, 2], [0], [0]>} : vector<2x8x8xf32>, vector<2x8x32xf32>, vector<2x8x32xf32> -> vector<2x8x32xf32>
    "tpu.trace_stop"() : () -> ()
    %c0_14 = arith.constant 0 : index
    %c0_15 = arith.constant 0 : index
    %c0_16 = arith.constant 0 : index
    %27 = vector.load %arg5[%c0_14, %c0_15, %c0_16] : memref<2x8x32xf32, #tpu.memory_space<vmem>>, vector<2x8x32xf32>
    tpu.vector_store %arg5[%c0_14, %c0_15, %c0_16], %26 {strides = array<i32>} : memref<2x8x32xf32, #tpu.memory_space<vmem>>, vector<2x8x32xf32>,
    return
  }
}

</mosaic_0001>

<llo_original>
// kernel: tpu_custom_call.1
$region0: #{tpu_custom_call.1}
  #allocation0 [shape = 'u32[]', space=smem, size = 0x4, offset = 0x4, fixed_abs, tag = 'smem constant byte address 0x4 - core index']
  #allocation1 [shape = 'u32[144,128]{1,0:T(1,128)}', space=vmem, size = 0x12000, scoped, tag = 'internal scratch']
  #allocation2 [shape = 'f32[1]{0:T(128)S(6)}', space=smem, size = 0x200, scoped, tag = 'scoped memory for tpu_custom_call.1']
  #allocation3 [shape = 'f32[1]{0:T(128)S(6)}', space=smem, size = 0x200, scoped, tag = 'scoped memory for tpu_custom_call.1']
  %s0 = inlined_call_operand.<no memory space> [shape: f32[1], index: 0, kind: input, shape index: {}]
  %s1 = inlined_call_operand.<no memory space> [shape: f32[1], index: 1, kind: input, shape index: {}]
  %s2 = inlined_call_operand.hbm [shape: f32[2,8,32], index: 2, kind: input, shape index: {}]
  %s3 = inlined_call_operand.hbm [shape: f32[2,8,32], index: 3, kind: input, shape index: {}]
  %s4 = inlined_call_operand.hbm [shape: f32[2,8,8], index: 4, kind: input, shape index: {}]
  %s5 = inlined_call_operand.hbm [shape: f32[2,8,32], index: 5, kind: output, shape index: {}]
  %s6 = sld [smem:[#allocation0]]
  $region42: #{tpu_custom_call.1} parent=0
    _
  %s8 = ssub.s32 1, %s6
  %s9 = scalar_select 0, %s8, %s6
  %10 = sst [smem:[#allocation2]] %s0
  %11 = sst [smem:[#allocation3]] %s1
  $region1: #{tpu_custom_call.1} parent=0
    #allocation4 [shape = 'u8[8192]{0}', space=vmem, size = 0x2000, scoped, tag = 'input window, operand 2, single buffered']
    #allocation5 [shape = 's32[1]{0}', space=sflag, size = 0x4, scoped, tag = 'scoped memory for tpu_custom_call.1']
    #allocation6 [shape = 's32[1]{0}', space=sflag, size = 0x4, scoped, tag = 'scoped memory for tpu_custom_call.1']
    #allocation7 [shape = 'u8[8192]{0}', space=vmem, size = 0x2000, scoped, tag = 'input window, operand 3, single buffered']
    #allocation8 [shape = 's32[1]{0}', space=sflag, size = 0x4, scoped, tag = 'scoped memory for tpu_custom_call.1']
    #allocation9 [shape = 'u8[8192]{0}', space=vmem, size = 0x2000, scoped, tag = 'input window, operand 4, single buffered']
    #allocation10 [shape = 'u8[8192]{0}', space=vmem, size = 0x2000, scoped, tag = 'output window, operand 0, single buffered']
    %12 = vsyncpa [#allocation5], 0
    %13 = vsyncpa [#allocation8], 0
    %14 = vsyncpa [#allocation6], 0
    // Predicated region
    $region2: #{tpu_custom_call.1} parent=1 // pred_check
      _
    $region3: #{tpu_custom_call.1} parent=1 // pred_check_branch
      %16 = sbr.rel (0) target = $region5
    $region4: #{tpu_custom_call.1} parent=1 // pred_region
      _
    $region5: #{tpu_custom_call.1} parent=1 // pred_fallthru
      _
    // Predicated region
    $region6: #{tpu_custom_call.1} parent=1 // pred_check
      _
    $region7: #{tpu_custom_call.1} parent=1 // pred_check_branch
      %18 = sbr.rel (0) target = $region9
    $region8: #{tpu_custom_call.1} parent=1 // pred_region
      _
    $region9: #{tpu_custom_call.1} parent=1 // pred_fallthru
      _
    // Predicated region
    $region10: #{tpu_custom_call.1} parent=1 // pred_check
      _
    $region11: #{tpu_custom_call.1} parent=1 // pred_check_branch
      %20 = sbr.rel (0) target = $region13
    $region12: #{tpu_custom_call.1} parent=1 // pred_region
      %s22 = ssub.s32 256, 256
      %23 = vsyncadd [#allocation5], %s22
      %s24 = sshll.u32 [#allocation4], 4
      %s25 = int_to_ptr.vmem [resolvable:$true] %s24
      %30 = dma.hbm_to_vmem [thread:$0]  %s2, 256, %s25, [#allocation5], 128, 128, 8
    $region13: #{tpu_custom_call.1} parent=1 // pred_fallthru
      _
    // Predicated region
    $region14: #{tpu_custom_call.1} parent=1 // pred_check
      _
    $region15: #{tpu_custom_call.1} parent=1 // pred_check_branch
      %32 = sbr.rel (0) target = $region17
    $region16: #{tpu_custom_call.1} parent=1 // pred_region
      %s34 = ssub.s32 256, 256
      %35 = vsyncadd [#allocation8], %s34
      %s36 = sshll.u32 [#allocation7], 4
      %s37 = int_to_ptr.vmem [resolvable:$true] %s36
      %42 = dma.hbm_to_vmem [thread:$0]  %s3, 256, %s37, [#allocation8], 128, 128, 8
    $region17: #{tpu_custom_call.1} parent=1 // pred_fallthru
      _
    // Predicated region
    $region18: #{tpu_custom_call.1} parent=1 // pred_check
      _
    $region19: #{tpu_custom_call.1} parent=1 // pred_check_branch
      %44 = sbr.rel (0) target = $region21
    $region20: #{tpu_custom_call.1} parent=1 // pred_region
      %s46 = ssub.s32 256, 256
      %47 = vsyncadd [#allocation8], %s46
      %s48 = sshll.u32 [#allocation9], 4
      %s49 = int_to_ptr.vmem [resolvable:$true] %s48
      %54 = dma.hbm_to_vmem [thread:$0]  %s4, 256, %s49, [#allocation8], 128, 128, 8
    $region21: #{tpu_custom_call.1} parent=1 // pred_fallthru
      _
    // Predicated region
    $region22: #{tpu_custom_call.1} parent=1 // pred_check
      _
    $region23: #{tpu_custom_call.1} parent=1 // pred_check_branch
      %56 = sbr.rel (0) target = $region25
    $region24: #{tpu_custom_call.1} parent=1 // pred_region
      %57 = dma.done [#allocation5], 256
    $region25: #{tpu_custom_call.1} parent=1 // pred_fallthru
      _
    // Predicated region
    $region26: #{tpu_custom_call.1} parent=1 // pred_check
      _
    $region27: #{tpu_custom_call.1} parent=1 // pred_check_branch
      %59 = sbr.rel (0) target = $region29
    $region28: #{tpu_custom_call.1} parent=1 // pred_region
      %60 = dma.done [#allocation8], 256
    $region29: #{tpu_custom_call.1} parent=1 // pred_fallthru
      _
    // Predicated region
    $region30: #{tpu_custom_call.1} parent=1 // pred_check
      _
    $region31: #{tpu_custom_call.1} parent=1 // pred_check_branch
      %62 = sbr.rel (0) target = $region33
    $region32: #{tpu_custom_call.1} parent=1 // pred_region
      %63 = dma.done [#allocation8], 256
    $region33: #{tpu_custom_call.1} parent=1 // pred_fallthru
      _
    %v64 = vld [vmem:[#allocation4] sm:$0xff]
    %v65 = vld [vmem:[#allocation4 + $0x8] sm:$0xff]
    %v66 = vld [vmem:[#allocation7] sm:$0xff]
    %v67 = vld [vmem:[#allocation7 + $0x8] sm:$0xff]
    %v68 = vld [vmem:[#allocation9] sm:$0xff]
    %v69 = vld [vmem:[#allocation9 + $0x8] sm:$0xff]
    %s70 = sld [smem:[#allocation2]]
    %s71 = sld [smem:[#allocation3]]
    %vm72 = vcmask 261120
    %v74 = vsel %vm72, %v64, 0
    %v77 = vsel %vm72, %v66, 0
    %79 = vmatprep.subr.mxu0 0.0
    %80 = vmatpush1.xpose.msra.mxu0 %v77
    %81 = vmatprep.subr.mxu0 0.0
    %82 = vmatpush1.xpose.msra.mxu0 0.0
    %83 = vmatprep.subr.mxu0 0.0
    %84 = vmatpush1.xpose.msra.mxu0 0.0
    %85 = vmatprep.subr.mxu0 0.0
    %86 = vmatpush1.xpose.msra.mxu0 0.0
    %87 = vmatprep.subr.mxu0 0.0
    %88 = vmatpush1.xpose.msra.mxu0 0.0
    %89 = vmatprep.subr.mxu0 0.0
    %90 = vmatpush1.xpose.msra.mxu0 0.0
    %91 = vmatprep.subr.mxu0 0.0
    %92 = vmatpush1.xpose.msra.mxu0 0.0
    %93 = vmatprep.subr.mxu0 0.0
    %94 = vmatpush1.xpose.msra.mxu0 0.0
    %95 = vmatprep.subr.mxu0 0.0
    %96 = vmatpush1.xpose.msra.mxu0 0.0
    %97 = vmatprep.subr.mxu0 0.0
    %98 = vmatpush1.xpose.msra.mxu0 0.0
    %99 = vmatprep.subr.mxu0 0.0
    %100 = vmatpush1.xpose.msra.mxu0 0.0
    %101 = vmatprep.subr.mxu0 0.0
    %102 = vmatpush1.xpose.msra.mxu0 0.0
    %103 = vmatprep.subr.mxu0 0.0
    %104 = vmatpush1.xpose.msra.mxu0 0.0
    %105 = vmatprep.subr.mxu0 0.0
    %106 = vmatpush1.xpose.msra.mxu0 0.0
    %107 = vmatprep.subr.mxu0 0.0
    %108 = vmatpush1.xpose.msra.mxu0 0.0
    %109 = vmatprep.subr.mxu0 0.0
    %110 = vmatpush1.xpose.msra.mxu0 0.0
    %111 = vmatprep.subr.mxu0 0.0
    %112 = vmatpush1.xpose.msra.mxu0 0.0
    %113 = vmatprep.subr.mxu0 0.0
    %114 = vmatpush1.xpose.msra.mxu0 0.0
    %115 = vmatprep.subr.mxu0 0.0
    %116 = vmatpush1.xpose.msra.mxu0 0.0
    %117 = vmatprep.subr.mxu0 0.0
    %118 = vmatpush1.xpose.msra.mxu0 0.0
    %119 = vmatprep.subr.mxu0 0.0
    %120 = vmatpush1.xpose.msra.mxu0 0.0
    %121 = vmatprep.subr.mxu0 0.0
    %122 = vmatpush1.xpose.msra.mxu0 0.0
    %123 = vmatprep.subr.mxu0 0.0
    %124 = vmatpush1.xpose.msra.mxu0 0.0
    %125 = vmatprep.subr.mxu0 0.0
    %126 = vmatpush1.xpose.msra.mxu0 0.0
    %127 = vmatprep.subr.mxu0 0.0
    %128 = vmatpush1.xpose.msra.mxu0 0.0
    %129 = vmatprep.subr.mxu0 0.0
    %130 = vmatpush1.xpose.msra.mxu0 0.0
    %131 = vmatprep.subr.mxu0 0.0
    %132 = vmatpush1.xpose.msra.mxu0 0.0
    %133 = vmatprep.subr.mxu0 0.0
    %134 = vmatpush1.xpose.msra.mxu0 0.0
    %135 = vmatprep.subr.mxu0 0.0
    %136 = vmatpush1.xpose.msra.mxu0 0.0
    %137 = vmatprep.subr.mxu0 0.0
    %138 = vmatpush1.xpose.msra.mxu0 0.0
    %139 = vmatprep.subr.mxu0 0.0
    %140 = vmatpush1.xpose.msra.mxu0 0.0
    %141 = vmatprep.subr.mxu0 0.0
    %142 = vmatpush1.xpose.msra.mxu0 0.0
    %143 = vmatprep.mubr.f32.mxu0 0.0
    %144 = vmatmul.mubr.f32.gmra.mrb[0].mxu0 %v74
    %v145 = vpop.f32.mrb[0].mxu0
    %v146 = vadd.f32 0.0, %v145
    %v147 = vpop.f32.mrb[0].mxu0
    %148 = vdwg.mxu0
    %v150 = vsel %vm72, %v65, 0
    %v153 = vsel %vm72, %v67, 0
    %155 = vmatprep.subr.mxu0 0.0
    %156 = vmatpush1.xpose.msra.mxu0 %v153
    %157 = vmatprep.subr.mxu0 0.0
    %158 = vmatpush1.xpose.msra.mxu0 0.0
    %159 = vmatprep.subr.mxu0 0.0
    %160 = vmatpush1.xpose.msra.mxu0 0.0
    %161 = vmatprep.subr.mxu0 0.0
    %162 = vmatpush1.xpose.msra.mxu0 0.0
    %163 = vmatprep.subr.mxu0 0.0
    %164 = vmatpush1.xpose.msra.mxu0 0.0
    %165 = vmatprep.subr.mxu0 0.0
    %166 = vmatpush1.xpose.msra.mxu0 0.0
    %167 = vmatprep.subr.mxu0 0.0
    %168 = vmatpush1.xpose.msra.mxu0 0.0
    %169 = vmatprep.subr.mxu0 0.0
    %170 = vmatpush1.xpose.msra.mxu0 0.0
    %171 = vmatprep.subr.mxu0 0.0
    %172 = vmatpush1.xpose.msra.mxu0 0.0
    %173 = vmatprep.subr.mxu0 0.0
    %174 = vmatpush1.xpose.msra.mxu0 0.0
    %175 = vmatprep.subr.mxu0 0.0
    %176 = vmatpush1.xpose.msra.mxu0 0.0
    %177 = vmatprep.subr.mxu0 0.0
    %178 = vmatpush1.xpose.msra.mxu0 0.0
    %179 = vmatprep.subr.mxu0 0.0
    %180 = vmatpush1.xpose.msra.mxu0 0.0
    %181 = vmatprep.subr.mxu0 0.0
    %182 = vmatpush1.xpose.msra.mxu0 0.0
    %183 = vmatprep.subr.mxu0 0.0
    %184 = vmatpush1.xpose.msra.mxu0 0.0
    %185 = vmatprep.subr.mxu0 0.0
    %186 = vmatpush1.xpose.msra.mxu0 0.0
    %187 = vmatprep.subr.mxu0 0.0
    %188 = vmatpush1.xpose.msra.mxu0 0.0
    %189 = vmatprep.subr.mxu0 0.0
    %190 = vmatpush1.xpose.msra.mxu0 0.0
    %191 = vmatprep.subr.mxu0 0.0
    %192 = vmatpush1.xpose.msra.mxu0 0.0
    %193 = vmatprep.subr.mxu0 0.0
    %194 = vmatpush1.xpose.msra.mxu0 0.0
    %195 = vmatprep.subr.mxu0 0.0
    %196 = vmatpush1.xpose.msra.mxu0 0.0
    %197 = vmatprep.subr.mxu0 0.0
    %198 = vmatpush1.xpose.msra.mxu0 0.0
    %199 = vmatprep.subr.mxu0 0.0
    %200 = vmatpush1.xpose.msra.mxu0 0.0
    %201 = vmatprep.subr.mxu0 0.0
    %202 = vmatpush1.xpose.msra.mxu0 0.0
    %203 = vmatprep.subr.mxu0 0.0
    %204 = vmatpush1.xpose.msra.mxu0 0.0
    %205 = vmatprep.subr.mxu0 0.0
    %206 = vmatpush1.xpose.msra.mxu0 0.0
    %207 = vmatprep.subr.mxu0 0.0
    %208 = vmatpush1.xpose.msra.mxu0 0.0
    %209 = vmatprep.subr.mxu0 0.0
    %210 = vmatpush1.xpose.msra.mxu0 0.0
    %211 = vmatprep.subr.mxu0 0.0
    %212 = vmatpush1.xpose.msra.mxu0 0.0
    %213 = vmatprep.subr.mxu0 0.0
    %214 = vmatpush1.xpose.msra.mxu0 0.0
    %215 = vmatprep.subr.mxu0 0.0
    %216 = vmatpush1.xpose.msra.mxu0 0.0
    %217 = vmatprep.subr.mxu0 0.0
    %218 = vmatpush1.xpose.msra.mxu0 0.0
    %219 = vmatprep.mubr.f32.mxu0 0.0
    %220 = vmatmul.mubr.f32.gmra.mrb[0].mxu0 %v150
    %v221 = vpop.f32.mrb[0].mxu0
    %v222 = vadd.f32 0.0, %v221
    %v223 = vpop.f32.mrb[0].mxu0
    %224 = vdwg.mxu0
    %v225 = vstv %s70
    %v226 = vmul.f32 %v146, %v225
    %v227 = vmul.f32 %v222, %v225
    %vm228 = vcmask 64512
    %v229 = vsel %vm228, %v226, -inf
    %230 = vmax.xlane.f32.xlu0 %v229
    %v231 = vpop.xlane.xlu0 %230
    %v232 = vsel %vm228, %v227, -inf
    %233 = vmax.xlane.f32.xlu0 %v232
    %v234 = vpop.xlane.xlu0 %233
    %v235 = vsub.f32 %v226, %v231
    %v236 = vsub.f32 %v227, %v234
    %v237 = vmul.f32 %v235, 1.442695
    %v238 = vpow.pop %v237
    %v239 = vmul.f32 %v236, 1.442695
    %v240 = vpow.pop %v239
    %v241 = vsel %vm228, %v238, 0.0
    %242 = vadd.xlane.f32.xlu0 %v241
    %v243 = vpop.xlane.xlu0 %242
    %v244 = vsel %vm228, %v240, 0.0
    %245 = vadd.xlane.f32.xlu0 %v244
    %v246 = vpop.xlane.xlu0 %245
    %v247 = vstv %s71
    %vm248 = vcmp.ge.f32.partialorder %v68, %v247
    %vm249 = vcmp.ge.f32.partialorder %v69, %v247
    %v250 = vsel %vm248, 1, 0
    %v251 = vsel %vm249, 1, 0
    %v252 = vcvt.s32.f32 %v250
    %v253 = vcvt.s32.f32 %v251
    %s254 = ssub.f32 1.0, %s71
    %v255 = vstv %s254
    %v256 = vmul.f32 %v243, %v255
    %v257 = vmul.f32 %v246, %v255
    %v258 = vrcp.pop %v256
    %v259 = vrcp.pop %v257
    %v260 = vmul.f32 %v238, %v252
    %v261 = vmul.f32 %v240, %v253
    %v262 = vmul.f32 %v260, %v258
    %v263 = vmul.f32 %v261, %v259
    %v265 = vsel %vm228, %v262, 0
    %267 = vmatprep.subr.mxu0 0.0
    %268 = vmatpush1.msra.mxu0 %v64
    %269 = vmatprep.subr.mxu0 0.0
    %270 = vmatpush1.msra.mxu0 0.0
    %271 = vmatprep.subr.mxu0 0.0
    %272 = vmatpush1.msra.mxu0 0.0
    %273 = vmatprep.subr.mxu0 0.0
    %274 = vmatpush1.msra.mxu0 0.0
    %275 = vmatprep.subr.mxu0 0.0
    %276 = vmatpush1.msra.mxu0 0.0
    %277 = vmatprep.subr.mxu0 0.0
    %278 = vmatpush1.msra.mxu0 0.0
    %279 = vmatprep.subr.mxu0 0.0
    %280 = vmatpush1.msra.mxu0 0.0
    %281 = vmatprep.subr.mxu0 0.0
    %282 = vmatpush1.msra.mxu0 0.0
    %283 = vmatprep.subr.mxu0 0.0
    %284 = vmatpush1.msra.mxu0 0.0
    %285 = vmatprep.subr.mxu0 0.0
    %286 = vmatpush1.msra.mxu0 0.0
    %287 = vmatprep.subr.mxu0 0.0
    %288 = vmatpush1.msra.mxu0 0.0
    %289 = vmatprep.subr.mxu0 0.0
    %290 = vmatpush1.msra.mxu0 0.0
    %291 = vmatprep.subr.mxu0 0.0
    %292 = vmatpush1.msra.mxu0 0.0
    %293 = vmatprep.subr.mxu0 0.0
    %294 = vmatpush1.msra.mxu0 0.0
    %295 = vmatprep.subr.mxu0 0.0
    %296 = vmatpush1.msra.mxu0 0.0
    %297 = vmatprep.subr.mxu0 0.0
    %298 = vmatpush1.msra.mxu0 0.0
    %299 = vmatprep.subr.mxu0 0.0
    %300 = vmatpush1.msra.mxu0 0.0
    %301 = vmatprep.subr.mxu0 0.0
    %302 = vmatpush1.msra.mxu0 0.0
    %303 = vmatprep.subr.mxu0 0.0
    %304 = vmatpush1.msra.mxu0 0.0
    %305 = vmatprep.subr.mxu0 0.0
    %306 = vmatpush1.msra.mxu0 0.0
    %307 = vmatprep.subr.mxu0 0.0
    %308 = vmatpush1.msra.mxu0 0.0
    %309 = vmatprep.subr.mxu0 0.0
    %310 = vmatpush1.msra.mxu0 0.0
    %311 = vmatprep.subr.mxu0 0.0
    %312 = vmatpush1.msra.mxu0 0.0
    %313 = vmatprep.subr.mxu0 0.0
    %314 = vmatpush1.msra.mxu0 0.0
    %315 = vmatprep.subr.mxu0 0.0
    %316 = vmatpush1.msra.mxu0 0.0
    %317 = vmatprep.subr.mxu0 0.0
    %318 = vmatpush1.msra.mxu0 0.0
    %319 = vmatprep.subr.mxu0 0.0
    %320 = vmatpush1.msra.mxu0 0.0
    %321 = vmatprep.subr.mxu0 0.0
    %322 = vmatpush1.msra.mxu0 0.0
    %323 = vmatprep.subr.mxu0 0.0
    %324 = vmatpush1.msra.mxu0 0.0
    %325 = vmatprep.subr.mxu0 0.0
    %326 = vmatpush1.msra.mxu0 0.0
    %327 = vmatprep.subr.mxu0 0.0
    %328 = vmatpush1.msra.mxu0 0.0
    %329 = vmatprep.subr.mxu0 0.0
    %330 = vmatpush1.msra.mxu0 0.0
    %331 = vmatprep.mubr.f32.mxu0 0.0
    %332 = vmatmul.mubr.f32.gmra.mrb[0].mxu0 %v265
    %v333 = vpop.f32.mrb[0].mxu0
    %v334 = vadd.f32 0.0, %v333
    %v335 = vpop.f32.mrb[0].mxu0
    %336 = vdwg.mxu0
    %v338 = vsel %vm228, %v263, 0
    %340 = vmatprep.subr.mxu0 0.0
    %341 = vmatpush1.msra.mxu0 %v65
    %342 = vmatprep.subr.mxu0 0.0
    %343 = vmatpush1.msra.mxu0 0.0
    %344 = vmatprep.subr.mxu0 0.0
    %345 = vmatpush1.msra.mxu0 0.0
    %346 = vmatprep.subr.mxu0 0.0
    %347 = vmatpush1.msra.mxu0 0.0
    %348 = vmatprep.subr.mxu0 0.0
    %349 = vmatpush1.msra.mxu0 0.0
    %350 = vmatprep.subr.mxu0 0.0
    %351 = vmatpush1.msra.mxu0 0.0
    %352 = vmatprep.subr.mxu0 0.0
    %353 = vmatpush1.msra.mxu0 0.0
    %354 = vmatprep.subr.mxu0 0.0
    %355 = vmatpush1.msra.mxu0 0.0
    %356 = vmatprep.subr.mxu0 0.0
    %357 = vmatpush1.msra.mxu0 0.0
    %358 = vmatprep.subr.mxu0 0.0
    %359 = vmatpush1.msra.mxu0 0.0
    %360 = vmatprep.subr.mxu0 0.0
    %361 = vmatpush1.msra.mxu0 0.0
    %362 = vmatprep.subr.mxu0 0.0
    %363 = vmatpush1.msra.mxu0 0.0
    %364 = vmatprep.subr.mxu0 0.0
    %365 = vmatpush1.msra.mxu0 0.0
    %366 = vmatprep.subr.mxu0 0.0
    %367 = vmatpush1.msra.mxu0 0.0
    %368 = vmatprep.subr.mxu0 0.0
    %369 = vmatpush1.msra.mxu0 0.0
    %370 = vmatprep.subr.mxu0 0.0
    %371 = vmatpush1.msra.mxu0 0.0
    %372 = vmatprep.subr.mxu0 0.0
    %373 = vmatpush1.msra.mxu0 0.0
    %374 = vmatprep.subr.mxu0 0.0
    %375 = vmatpush1.msra.mxu0 0.0
    %376 = vmatprep.subr.mxu0 0.0
    %377 = vmatpush1.msra.mxu0 0.0
    %378 = vmatprep.subr.mxu0 0.0
    %379 = vmatpush1.msra.mxu0 0.0
    %380 = vmatprep.subr.mxu0 0.0
    %381 = vmatpush1.msra.mxu0 0.0
    %382 = vmatprep.subr.mxu0 0.0
    %383 = vmatpush1.msra.mxu0 0.0
    %384 = vmatprep.subr.mxu0 0.0
    %385 = vmatpush1.msra.mxu0 0.0
    %386 = vmatprep.subr.mxu0 0.0
    %387 = vmatpush1.msra.mxu0 0.0
    %388 = vmatprep.subr.mxu0 0.0
    %389 = vmatpush1.msra.mxu0 0.0
    %390 = vmatprep.subr.mxu0 0.0
    %391 = vmatpush1.msra.mxu0 0.0
    %392 = vmatprep.subr.mxu0 0.0
    %393 = vmatpush1.msra.mxu0 0.0
    %394 = vmatprep.subr.mxu0 0.0
    %395 = vmatpush1.msra.mxu0 0.0
    %396 = vmatprep.subr.mxu0 0.0
    %397 = vmatpush1.msra.mxu0 0.0
    %398 = vmatprep.subr.mxu0 0.0
    %399 = vmatpush1.msra.mxu0 0.0
    %400 = vmatprep.subr.mxu0 0.0
    %401 = vmatpush1.msra.mxu0 0.0
    %402 = vmatprep.subr.mxu0 0.0
    %403 = vmatpush1.msra.mxu0 0.0
    %404 = vmatprep.mubr.f32.mxu0 0.0
    %405 = vmatmul.mubr.f32.gmra.mrb[0].mxu0 %v338
    %v406 = vpop.f32.mrb[0].mxu0
    %v407 = vadd.f32 0.0, %v406
    %v408 = vpop.f32.mrb[0].mxu0
    %409 = vdwg.mxu0
    %410 = vst.msk [vmem:[#allocation10] sm:$0xff] %vm72, %v334
    %411 = vst.msk [vmem:[#allocation10 + $0x8] sm:$0xff] %vm72, %v407
    // Predicated region
    $region34: #{tpu_custom_call.1} parent=1 // pred_check
      _
    $region35: #{tpu_custom_call.1} parent=1 // pred_check_branch
      %413 = sbr.rel (0) target = $region37
    $region36: #{tpu_custom_call.1} parent=1 // pred_region
      %s415 = ssub.s32 256, 256
      %416 = vsyncadd [#allocation6], %s415
      %s417 = sshll.u32 [#allocation10], 4
      %s418 = int_to_ptr.vmem [resolvable:$true] %s417
      %423 = dma.vmem_to_hbm [thread:$0]  %s418, 256, %s5, [#allocation6], 128, 128, 8
    $region37: #{tpu_custom_call.1} parent=1 // pred_fallthru
      _
    // Predicated region
    $region38: #{tpu_custom_call.1} parent=1 // pred_check
      _
    $region39: #{tpu_custom_call.1} parent=1 // pred_check_branch
      %425 = sbr.rel (0) target = $region41
    $region40: #{tpu_custom_call.1} parent=1 // pred_region
      %426 = dma.done [#allocation6], 256
    $region41: #{tpu_custom_call.1} parent=1 // pred_fallthru
      _
    %427 = vsyncpa [#allocation5], 1
    %428 = vsyncpa [#allocation8], 1
    %429 = vsyncpa [#allocation6], 1

</llo_original>
